<compile_context>
chip_gen: v5e
topology: v5e:2x2
jax: 0.10.0
libtpu: 0.0.40
codegen_flags: <defaults>
</compile_context>

<pallas_src>
import functools
import numpy as np
import jax
import jax.numpy as jnp
from jax import lax
from jax.experimental import pallas as pl
from jax.experimental.pallas import tpu as pltpu

_LANE = 128
_SUBLANE = 8


def _round_up(x, m):
    return ((x + m - 1) // m) * m


# ---------------------------------------------------------------------------
# Deterministic parameter construction (mirrors init_kernels in tools.py).
# ---------------------------------------------------------------------------
def _hamming_periodic(win_len):
    # == scipy.signal.get_window('hamming', win_len, fftbins=True)
    n = np.arange(win_len)
    return 0.54 - 0.46 * np.cos(2.0 * np.pi * n / win_len)


def init_kernels(win_len, fft_len, win_type="hamming"):
    if win_type == "None" or win_type is None:
        window = np.ones(win_len)
    elif win_type == "hamming":
        window = _hamming_periodic(win_len)
    else:
        raise ValueError(f"unsupported win_type: {win_type}")
    N = fft_len
    fourier_basis = np.fft.rfft(np.eye(N))[:win_len]          # (win_len, N//2+1) complex
    real_kernel = np.real(fourier_basis)
    imag_kernel = np.imag(fourier_basis)
    kernel = np.concatenate([real_kernel, imag_kernel], 1).T  # (2F, win_len)
    kernel = kernel * window                                  # window over taps
    return kernel.astype(np.float32), window.astype(np.float32)


# ---------------------------------------------------------------------------
# Cheap atan2: A&S 4.4.47 minimax polynomial on [0,1], |err| <= ~1e-5.
# One divide + a handful of VPU ops instead of the heavy arctan2 lowering.
# ---------------------------------------------------------------------------
def _atan2_poly(y, x):
    ax = jnp.abs(x)
    ay = jnp.abs(y)
    hi = jnp.maximum(ax, ay)
    lo = jnp.minimum(ax, ay)
    t = lo / jnp.maximum(hi, 1e-30)          # in [0, 1]; 0 when both inputs are 0
    t2 = t * t
    p = 0.0208351
    p = p * t2 - 0.0851330
    p = p * t2 + 0.1801410
    p = p * t2 - 0.3302995
    p = p * t2 + 0.9998660
    a = p * t                                 # atan(t), t in [0,1]
    a = jnp.where(ay > ax, (0.5 * np.pi) - a, a)
    a = jnp.where(x < 0.0, np.pi - a, a)
    return jnp.where(y < 0.0, -a, a)


# ---------------------------------------------------------------------------
# Pallas kernels.
#   chunk_ref: (stride, tile_t + n_shift - 1)  hop-major samples for this block
#   w_ref:     (C, n_shift*stride)             analysis weights, taps zero-padded
#   out block: (C, tile_t)                     conv (channels, time) layout
# The strided conv is decomposed into n_shift shifted sub-matmuls, so the
# overlapping frame matrix is never materialized anywhere.
# ---------------------------------------------------------------------------
def _conv_acc(chunk_ref, w_ref, *, stride, n_shift, tile_t):
    acc = None
    for j in range(n_shift):                  # static, small (ceil(win/stride))
        part = jnp.dot(w_ref[:, j * stride:(j + 1) * stride],
                       chunk_ref[:, j:j + tile_t],
                       preferred_element_type=jnp.float32)
        acc = part if acc is None else acc + part
    return acc


def _stft_mag_phase_kernel(chunk_ref, w_ref, mags_ref, phase_ref, *,
                           stride, n_shift, tile_t, f_half):
    acc = _conv_acc(chunk_ref, w_ref, stride=stride, n_shift=n_shift, tile_t=tile_t)
    real = acc[:f_half, :]                    # sublane-aligned split (f_half % 8 == 0)
    imag = acc[f_half:, :]
    r2 = real * real + imag * imag
    mags_ref[...] = r2 * lax.rsqrt(r2 + 1e-30)   # sqrt via EUP rsqrt
    phase_ref[...] = _atan2_poly(imag, real)


def _stft_complex_kernel(chunk_ref, w_ref, out_ref, *, stride, n_shift, tile_t):
    out_ref[...] = _conv_acc(chunk_ref, w_ref,
                             stride=stride, n_shift=n_shift, tile_t=tile_t)


# ---------------------------------------------------------------------------
# Module wrapper.
# ---------------------------------------------------------------------------
class ConvSTFT:
    def __init__(self, win_len, win_inc, fft_len=None, win_type="hamming",
                 feature_type="real", tile_t=1024, compute_dtype=jnp.float32):
        if fft_len is None:
            self.fft_len = int(2 ** np.ceil(np.log2(win_len)))
        else:
            self.fft_len = fft_len
        kernel, _ = init_kernels(win_len, self.fft_len, win_type)
        self.weight = jnp.asarray(kernel)          # (2F, win_len) — reference layout
        self.feature_type = feature_type
        self.stride = win_inc
        self.win_len = win_len
        self.dim = self.fft_len
        self.compute_dtype = compute_dtype         # bf16 optional (see header note)

        F = self.fft_len // 2 + 1
        self.f_bins = F
        self.n_shift = -(-win_len // win_inc)      # ceil(win_len / stride)
        self.w_taps = self.n_shift * win_inc       # taps padded to a stride multiple

        # Real path weights, (C, W) layout: [real | imag] halves, each padded to a
        # sublane multiple so the in-kernel split stays aligned.
        self.f_split = _round_up(F, _SUBLANE)
        w_real = np.zeros((2 * self.f_split, self.w_taps), np.float32)
        w_real[:F, :win_len] = kernel[:F]
        w_real[self.f_split:self.f_split + F, :win_len] = kernel[F:]
        self.w_realT = jnp.asarray(w_real, dtype=compute_dtype)

        # Complex path weights: channels stay in PyTorch order (real block then
        # imag block), only the tail is padded -> final crop is a single slice.
        self.c_cplx = _round_up(2 * F, _SUBLANE)
        w_cplx = np.zeros((self.c_cplx, self.w_taps), np.float32)
        w_cplx[:2 * F, :win_len] = kernel
        self.w_cplxT = jnp.asarray(w_cplx, dtype=compute_dtype)

        # Lane-dense time tile (multiple of 128).  Per-step VMEM stays well under
        # the 32 MiB scoped default for typical STFT sizes; set vmem_limit_bytes
        # via CompilerParams if you raise this a lot (v7x has only 64 MiB total).
        self.tile_t = max(_LANE, _round_up(tile_t, _LANE))

    def __call__(self, inputs):
        if inputs.ndim == 3:                        # (B, 1, T) -> (B, T)
            inputs = inputs.reshape(inputs.shape[0], inputs.shape[-1])
        x = inputs.astype(jnp.float32)
        B, T = x.shape
        stride = self.stride
        win = self.win_len
        pad = win - stride
        Tp = T + 2 * pad
        T_out = (Tp - win) // stride + 1
        F = self.f_bins

        # Time tiling; make sure the grid has >= 2 steps when possible so both of
        # v7x's TensorCores get work (v5e/v6e have 1 TC, unaffected).
        tile_t = min(self.tile_t, _round_up(T_out, _LANE))
        if B * pl.cdiv(T_out, tile_t) < 2 and T_out > _LANE:
            tile_t = _round_up(pl.cdiv(T_out, 2), _LANE)
        n_tb = pl.cdiv(T_out, tile_t)
        T_out_pad = n_tb * tile_t

        n_shift = self.n_shift
        row_span = tile_t + n_shift - 1             # hop rows needed per grid step
        n_rows = T_out_pad + n_shift - 1
        Tsig = n_rows * stride                      # samples covering every block

        # Same padding semantics as F.pad(inputs, [pad, pad]); extra right zeros
        # (or truncation of never-used tail samples) only cover padded frames.
        sig = jnp.pad(x, ((0, 0), (pad, pad)))
        if Tsig >= Tp:
            sig = jnp.pad(sig, ((0, 0), (0, Tsig - Tp)))
        else:
            sig = sig[:, :Tsig]

        # Per-block contiguous chunks, hop-major:
        #   chunks[b, t, s, u] = sig[b, (t*tile_t + u)*stride + s]
        # Only the win-stride overlap between consecutive blocks is duplicated
        # (~1.01x signal size) vs. the old win/stride x frames2d blow-up.
        # TODO(synk): fully zero-copy variant — keep sig in HBM via
        # memory_space=pl.ANY and DMA each chunk in-kernel (double-buffered).
        samp_idx = ((jnp.arange(n_tb) * tile_t)[:, None, None]
                    + jnp.arange(row_span)[None, None, :]) * stride \
                   + jnp.arange(stride)[None, :, None]           # (n_tb, stride, row_span)
        chunks = sig[:, samp_idx].astype(self.compute_dtype)     # (B, n_tb, stride, row_span)

        grid = (B, n_tb)
        chunk_spec = pl.BlockSpec((None, None, stride, row_span),
                                  lambda b, t: (b, t, 0, 0))
        cparams = pltpu.CompilerParams(
            dimension_semantics=("parallel", "parallel"))

        if self.feature_type == "complex":
            C = self.c_cplx
            out3 = pl.pallas_call(
                functools.partial(_stft_complex_kernel, stride=stride,
                                  n_shift=n_shift, tile_t=tile_t),
                out_shape=jax.ShapeDtypeStruct((B, C, T_out_pad), jnp.float32),
                grid=grid,
                in_specs=[chunk_spec,
                          pl.BlockSpec((C, self.w_taps), lambda b, t: (0, 0))],
                out_specs=pl.BlockSpec((None, C, tile_t), lambda b, t: (b, 0, t)),
                compiler_params=cparams,
            )(chunks, self.w_cplxT)
            return out3[:, :2 * F, :T_out]                        # (B, 2F, T_out)

        C = 2 * self.f_split
        out_spec = pl.BlockSpec((None, self.f_split, tile_t), lambda b, t: (b, 0, t))
        mags3, phase3 = pl.pallas_call(
            functools.partial(_stft_mag_phase_kernel, stride=stride,
                              n_shift=n_shift, tile_t=tile_t, f_half=self.f_split),
            out_shape=(jax.ShapeDtypeStruct((B, self.f_split, T_out_pad), jnp.float32),
                       jax.ShapeDtypeStruct((B, self.f_split, T_out_pad), jnp.float32)),
            grid=grid,
            in_specs=[chunk_spec,
                      pl.BlockSpec((C, self.w_taps), lambda b, t: (0, 0))],
            out_specs=(out_spec, out_spec),
            compiler_params=cparams,
        )(chunks, self.w_realT)
        return mags3[:, :F, :T_out], phase3[:, :F, :T_out]        # (B, F, T_out) each


# ---------------------------------------------------------------------------
# Pure-JAX references (mirror the PyTorch conv1d forward) for verification.
# ---------------------------------------------------------------------------
def _frames_ref(x, win_len, stride):
    pad = win_len - stride
    padded = jnp.pad(x, ((0, 0), (pad, pad)))
    T_out = (padded.shape[1] - win_len) // stride + 1
    idx = jnp.arange(T_out)[:, None] * stride + jnp.arange(win_len)[None, :]
    return padded[:, idx]                                         # (B, T_out, W)


def _reference_real(x, weight, win_len, stride, fft_len):
    frames = _frames_ref(x, win_len, stride)
    out = jnp.einsum("btw,fw->bft", frames, weight)               # (B, 2F, T_out)
    F_bins = fft_len // 2 + 1
    real, imag = out[:, :F_bins, :], out[:, F_bins:, :]
    return jnp.sqrt(real ** 2 + imag ** 2), jnp.arctan2(imag, real)


def _reference_complex(x, weight, win_len, stride):
    frames = _frames_ref(x, win_len, stride)
    return jnp.einsum("btw,fw->bft", frames, weight)              # (B, 2F, T_out)


if __name__ == "__main__":
    root = jax.random.PRNGKey(0)
    k1, k2, k3 = jax.random.split(root, 3)

    # Phase tolerance is slightly looser than mags: near-zero-magnitude bins
    # amplify matmul rounding differences (and the atan2 poly adds <=1e-5).
    MAG_TOL = dict(rtol=1e-3, atol=1e-3)
    PH_TOL = dict(rtol=1e-3, atol=3e-3)

    # --- real path, small shapes ------------------------------------------------
    win_len, win_inc, fft_len = 16, 8, 16
    B, T = 2, 64
    x = jax.random.normal(k1, (B, T), dtype=jnp.float32)
    stft = ConvSTFT(win_len, win_inc, fft_len, win_type="hamming", feature_type="real")
    mags, phase = jax.block_until_ready(stft(x))
    mags_ref, phase_ref = _reference_real(x, stft.weight, win_len, win_inc, fft_len)
    assert mags.shape == mags_ref.shape and phase.shape == phase_ref.shape
    np.testing.assert_allclose(np.asarray(mags), np.asarray(mags_ref), **MAG_TOL)
    np.testing.assert_allclose(np.asarray(phase), np.asarray(phase_ref), **PH_TOL)

    # --- real path, multi-block time grid (chunk overlap across block boundary) --
    x_long = jax.random.normal(k2, (1, 1600), dtype=jnp.float32)
    stft_mb = ConvSTFT(win_len, win_inc, fft_len, feature_type="real", tile_t=128)
    mags2, phase2 = jax.block_until_ready(stft_mb(x_long))
    m2_ref, p2_ref = _reference_real(x_long, stft_mb.weight, win_len, win_inc, fft_len)
    np.testing.assert_allclose(np.asarray(mags2), np.asarray(m2_ref), **MAG_TOL)
    np.testing.assert_allclose(np.asarray(phase2), np.asarray(p2_ref), **PH_TOL)

    # --- real path, win_len not a multiple of stride (zero-padded taps) ----------
    x_f = jax.random.normal(k3, (2, 160), dtype=jnp.float32)
    stft_f = ConvSTFT(20, 8, 32, win_type="hamming", feature_type="real")
    mags3, phase3 = jax.block_until_ready(stft_f(x_f))
    m3_ref, p3_ref = _reference_real(x_f, stft_f.weight, 20, 8, 32)
    np.testing.assert_allclose(np.asarray(mags3), np.asarray(m3_ref), **MAG_TOL)
    np.testing.assert_allclose(np.asarray(phase3), np.asarray(p3_ref), **PH_TOL)

    # --- complex path -------------------------------------------------------------
    stft_c = ConvSTFT(win_len, win_inc, fft_len, win_type="hamming",
                      feature_type="complex")
    out_c = jax.block_until_ready(stft_c(x))
    out_c_ref = _reference_complex(x, stft_c.weight, win_len, win_inc)
    assert out_c.shape == out_c_ref.shape
    np.testing.assert_allclose(np.asarray(out_c), np.asarray(out_c_ref), **MAG_TOL)

    print("KERNEL_OK")
</pallas_src>

<mosaic_0001>
module attributes {stable_mosaic.version = 11 : i64} {
  func.func @_stft_mag_phase_kernel(%arg0: i32, %arg1: i32, %arg2: memref<1x1x8x129xf32, #tpu.memory_space<vmem>>, %arg3: memref<32x16xf32, #tpu.memory_space<vmem>>, %arg4: memref<1x16x128xf32, #tpu.memory_space<vmem>>, %arg5: memref<1x16x128xf32, #tpu.memory_space<vmem>>) attributes {dimension_semantics = [#tpu.dimension_semantics<parallel>, #tpu.dimension_semantics<parallel>], iteration_bounds = array<i64: 2, 1>, scalar_prefetch = 0 : i64, scratch_operands = 0 : i64, tpu.core_type = #tpu.core_type<tc>, window_params = [{transform_indices = @transform_0, window_bounds = array<i64: 1, 1, 8, 129>}, {pipeline_mode = #tpu.pipeline_mode<synchronous>, transform_indices = @transform_1, window_bounds = array<i64: 32, 16>}, {transform_indices = @transform_2, window_bounds = array<i64: 1, 16, 128>}, {transform_indices = @transform_3, window_bounds = array<i64: 1, 16, 128>}]} {
    %c0 = arith.constant 0 : index
    %c0_0 = arith.constant 0 : index
    %0 = vector.load %arg3[%c0, %c0_0] : memref<32x16xf32, #tpu.memory_space<vmem>>, vector<32x8xf32>
    %c0_1 = arith.constant 0 : index
    %c0_2 = arith.constant 0 : index
    %c0_3 = arith.constant 0 : index
    %c0_4 = arith.constant 0 : index
    %1 = vector.load %arg2[%c0_1, %c0_2, %c0_3, %c0_4] : memref<1x1x8x129xf32, #tpu.memory_space<vmem>>, vector<1x1x8x128xf32>
    %2 = vector.shape_cast %1 : vector<1x1x8x128xf32> to vector<8x128xf32>
    %cst = arith.constant dense<0.000000e+00> : vector<32x128xf32>
    %3 = tpu.matmul %0, %2, %cst {dimension_numbers = #tpu.dot_dimension_numbers<[1], [0], [0], [1], [0, 0, 1, 1], [], []>} : vector<32x8xf32>, vector<8x128xf32>, vector<32x128xf32> -> vector<32x128xf32>
    %c0_5 = arith.constant 0 : index
    %c8 = arith.constant 8 : index
    %4 = vector.load %arg3[%c0_5, %c8] : memref<32x16xf32, #tpu.memory_space<vmem>>, vector<32x8xf32>
    %c0_6 = arith.constant 0 : index
    %c0_7 = arith.constant 0 : index
    %c0_8 = arith.constant 0 : index
    %c1 = arith.constant 1 : index
    %5 = vector.load %arg2[%c0_6, %c0_7, %c0_8, %c1] : memref<1x1x8x129xf32, #tpu.memory_space<vmem>>, vector<1x1x8x128xf32>
    %6 = vector.shape_cast %5 : vector<1x1x8x128xf32> to vector<8x128xf32>
    %cst_9 = arith.constant dense<0.000000e+00> : vector<32x128xf32>
    %7 = tpu.matmul %4, %6, %cst_9 {dimension_numbers = #tpu.dot_dimension_numbers<[1], [0], [0], [1], [0, 0, 1, 1], [], []>} : vector<32x8xf32>, vector<8x128xf32>, vector<32x128xf32> -> vector<32x128xf32>
    %8 = arith.addf %3, %7 : vector<32x128xf32>
    %9 = vector.extract_strided_slice %8 {offsets = [0, 0], sizes = [16, 128], strides = [1, 1]} : vector<32x128xf32> to vector<16x128xf32>
    %10 = vector.extract_strided_slice %8 {offsets = [16, 0], sizes = [16, 128], strides = [1, 1]} : vector<32x128xf32> to vector<16x128xf32>
    %11 = arith.mulf %9, %9 : vector<16x128xf32>
    %12 = arith.mulf %10, %10 : vector<16x128xf32>
    %13 = arith.addf %11, %12 : vector<16x128xf32>
    %cst_10 = arith.constant 1.000000e-30 : f32
    %14 = vector.broadcast %cst_10 : f32 to vector<16x128xf32>
    %15 = arith.addf %13, %14 : vector<16x128xf32>
    %16 = math.rsqrt %15 : vector<16x128xf32>
    %17 = arith.mulf %13, %16 : vector<16x128xf32>
    %c0_11 = arith.constant 0 : index
    %c0_12 = arith.constant 0 : index
    %c0_13 = arith.constant 0 : index
    %18 = vector.load %arg4[%c0_11, %c0_12, %c0_13] : memref<1x16x128xf32, #tpu.memory_space<vmem>>, vector<1x16x128xf32>
    %19 = vector.shape_cast %18 : vector<1x16x128xf32> to vector<16x128xf32>
    %20 = vector.shape_cast %17 : vector<16x128xf32> to vector<1x16x128xf32>
    tpu.vector_store %arg4[%c0_11, %c0_12, %c0_13], %20 {strides = array<i32>} : memref<1x16x128xf32, #tpu.memory_space<vmem>>, vector<1x16x128xf32>,
    %21 = math.absf %9 : vector<16x128xf32>
    %22 = math.absf %10 : vector<16x128xf32>
    %23 = arith.maximumf %21, %22 : vector<16x128xf32>
    %24 = arith.minimumf %21, %22 : vector<16x128xf32>
    %cst_14 = arith.constant 1.000000e-30 : f32
    %25 = vector.broadcast %cst_14 : f32 to vector<16x128xf32>
    %26 = arith.maximumf %23, %25 : vector<16x128xf32>
    %27 = arith.divf %24, %26 : vector<16x128xf32>
    %28 = arith.mulf %27, %27 : vector<16x128xf32>
    %cst_15 = arith.constant 2.083510e-02 : f32
    %29 = vector.broadcast %cst_15 : f32 to vector<16x128xf32>
    %30 = arith.mulf %29, %28 : vector<16x128xf32>
    %cst_16 = arith.constant 8.513300e-02 : f32
    %31 = vector.broadcast %cst_16 : f32 to vector<16x128xf32>
    %32 = arith.subf %30, %31 : vector<16x128xf32>
    %33 = arith.mulf %32, %28 : vector<16x128xf32>
    %cst_17 = arith.constant 1.801410e-01 : f32
    %34 = vector.broadcast %cst_17 : f32 to vector<16x128xf32>
    %35 = arith.addf %33, %34 : vector<16x128xf32>
    %36 = arith.mulf %35, %28 : vector<16x128xf32>
    %cst_18 = arith.constant 0.330299497 : f32
    %37 = vector.broadcast %cst_18 : f32 to vector<16x128xf32>
    %38 = arith.subf %36, %37 : vector<16x128xf32>
    %39 = arith.mulf %38, %28 : vector<16x128xf32>
    %cst_19 = arith.constant 9.998660e-01 : f32
    %40 = vector.broadcast %cst_19 : f32 to vector<16x128xf32>
    %41 = arith.addf %39, %40 : vector<16x128xf32>
    %42 = arith.mulf %41, %27 : vector<16x128xf32>
    %43 = arith.cmpf ogt, %22, %21 : vector<16x128xf32>
    %cst_20 = arith.constant 1.57079637 : f32
    %44 = vector.broadcast %cst_20 : f32 to vector<16x128xf32>
    %45 = arith.subf %44, %42 : vector<16x128xf32>
    %46 = arith.select %43, %45, %42 : vector<16x128xi1>, vector<16x128xf32>
    %cst_21 = arith.constant 0.000000e+00 : f32
    %47 = vector.broadcast %cst_21 : f32 to vector<16x128xf32>
    %48 = arith.cmpf olt, %9, %47 : vector<16x128xf32>
    %cst_22 = arith.constant 3.14159274 : f32
    %49 = vector.broadcast %cst_22 : f32 to vector<16x128xf32>
    %50 = arith.subf %49, %46 : vector<16x128xf32>
    %51 = arith.select %48, %50, %46 : vector<16x128xi1>, vector<16x128xf32>
    %cst_23 = arith.constant 0.000000e+00 : f32
    %52 = vector.broadcast %cst_23 : f32 to vector<16x128xf32>
    %53 = arith.cmpf olt, %10, %52 : vector<16x128xf32>
    %cst_24 = arith.constant 0.000000e+00 : f32
    %54 = vector.broadcast %cst_24 : f32 to vector<16x128xf32>
    %55 = arith.subf %54, %51 : vector<16x128xf32>
    %56 = arith.select %53, %55, %51 : vector<16x128xi1>, vector<16x128xf32>
    %c0_25 = arith.constant 0 : index
    %c0_26 = arith.constant 0 : index
    %c0_27 = arith.constant 0 : index
    %57 = vector.load %arg5[%c0_25, %c0_26, %c0_27] : memref<1x16x128xf32, #tpu.memory_space<vmem>>, vector<1x16x128xf32>
    %58 = vector.shape_cast %57 : vector<1x16x128xf32> to vector<16x128xf32>
    %59 = vector.shape_cast %56 : vector<16x128xf32> to vector<1x16x128xf32>
    tpu.vector_store %arg5[%c0_25, %c0_26, %c0_27], %59 {strides = array<i32>} : memref<1x16x128xf32, #tpu.memory_space<vmem>>, vector<1x16x128xf32>,
    return
  }
  func.func @transform_0(%arg0: i32, %arg1: i32) -> (i32, i32, i32, i32) {
    %c0_i32 = arith.constant 0 : i32
    %c0_i32_0 = arith.constant 0 : i32
    %c0_i32_1 = arith.constant 0 : i32
    return %arg0, %arg1, %c0_i32, %c0_i32_0 : i32, i32, i32, i32
  }
  func.func @transform_1(%arg0: i32, %arg1: i32) -> (i32, i32) {
    %c0_i32 = arith.constant 0 : i32
    %c0_i32_0 = arith.constant 0 : i32
    %c0_i32_1 = arith.constant 0 : i32
    return %c0_i32, %c0_i32_0 : i32, i32
  }
  func.func @transform_2(%arg0: i32, %arg1: i32) -> (i32, i32, i32) {
    %c0_i32 = arith.constant 0 : i32
    %c0_i32_0 = arith.constant 0 : i32
    return %arg0, %c0_i32, %arg1 : i32, i32, i32
  }
  func.func @transform_3(%arg0: i32, %arg1: i32) -> (i32, i32, i32) {
    %c0_i32 = arith.constant 0 : i32
    %c0_i32_0 = arith.constant 0 : i32
    return %arg0, %c0_i32, %arg1 : i32, i32, i32
  }
}

</mosaic_0001>

<llo_original>
// kernel: tpu_custom_call.1
$region0: #{tpu_custom_call.1}
  #allocation0 [shape = 'u32[]', space=smem, size = 0x4, offset = 0x4, fixed_abs, tag = 'smem constant byte address 0x4 - core index']
  #allocation1 [shape = 'u32[72,128]{1,0:T(1,128)}', space=vmem, size = 0x9000, scoped, tag = 'internal scratch']
  %s0 = inlined_call_operand.vmem [shape: f32[2,1,8,129], index: 0, kind: input, shape index: {}]
  %s1 = inlined_call_operand.vmem [shape: f32[32,16], index: 1, kind: input, shape index: {}]
  %s2 = inlined_call_operand.hbm [shape: f32[2,16,128], index: 2, kind: output, shape index: {0}]
  %s3 = inlined_call_operand.hbm [shape: f32[2,16,128], index: 3, kind: output, shape index: {1}]
  %4 = xla_tuple %s2, %s3
  %s5 = sld [smem:[#allocation0]]
  $region49: #{tpu_custom_call.1} parent=0
    _
  %s7 = ssub.s32 1, %s5
  %s8 = scalar_select 0, %s7, %s5
  $region1: #{tpu_custom_call.1} parent=0
    #allocation2 [shape = 'u8[16384]{0}', space=vmem, size = 0x4000, scoped, tag = 'output window, operand 0']
    #allocation3 [shape = 's32[2]{0}', space=sflag, size = 0x8, scoped, tag = 'scoped memory for tpu_custom_call.1']
    #allocation4 [shape = 'u8[16384]{0}', space=vmem, size = 0x4000, scoped, tag = 'output window, operand 1']
    #allocation5 [shape = 's32[2]{0}', space=sflag, size = 0x8, scoped, tag = 'scoped memory for tpu_custom_call.1']
    %9 = vsyncpa [#allocation3], 0
    %s10 = scalar_lea.sflag [#allocation3], 1
    %11 = vsyncpa %s10, 0
    %12 = vsyncpa [#allocation5], 0
    %s13 = scalar_lea.sflag [#allocation5], 1
    %14 = vsyncpa %s13, 0
    loop: start=0, step=1, limit=4
    $region2: #{tpu_custom_call.1} parent=1 // loop_pre_header
      _
    $region3: #{tpu_custom_call.1} parent=1 // loop_header
      %s16 = sphi 0, %s20
      %p17 = scmp.ge.s32.totalorder %s16, 4
      %s23 = sphi 0, %s35
      %s24 = sphi 0, %s31
      %s25 = sphi 0, %s23
      %s26 = sphi 0, %s24
      %s27 = sphi 0, %s25
      %s28 = sphi 0, %s26
      %s40 = sphi 0, %s42
      %s43 = sphi 0, %s40
      %s44 = sphi 0, %s43
      %s60 = sphi 0, %s44
      %s64 = sphi 0, %s64
      %s66 = sphi 0, %s64
      %s67 = sphi 0, %s66
      %s81 = sphi 0, %s67
      %s89 = sphi 0, %s91
      %s92 = sphi 0, %s89
      %s93 = sphi 0, %s92
      %s109 = sphi 0, %s93
      %s117 = sphi 0, %s119
      %s120 = sphi 0, %s117
      %s121 = sphi 0, %s120
      %s137 = sphi 0, %s121
    $region4: #{tpu_custom_call.1} parent=1 // loop_header_branch
      %19 = sbr.rel (%p17) target = $region8
    $region5: #{tpu_custom_call.1} parent=1 // loop_body
      %s21 = ssub.s32 %s16, 1
      %s22 = ssub.s32 %s16, 2
      %s29 = sadd.s32 1, %s24
      %p30 = scmp.ge.s32.totalorder %s29, 1
      %s31 = scalar_select %p30, 0, %s29
      %s32 = sadd.s32 1, %s23
      %s33 = scalar_select %p30, %s32, %s23
      %p34 = scmp.ge.s32.totalorder %s33, 2
      %s35 = scalar_select %p34, 0, %s33
      %s36 = ssub.s32 %s23, %s35
      %s37 = ssub.s32 %s24, %s31
      %s38 = sor.u32 %s36, %s37
      %p39 = scmp.eq.s32.totalorder %s38, 0
      %s41 = sadd.s32 %s40, 1
      %s42 = scalar_select %p39, %s40, %s41
      %p45 = pneg %p39
      %p46 = scmp.eq.s32.totalorder %s16, 1
      %p47 = por %p45, %p46
      %p48 = scmp.ne.s32.totalorder %s40, %s43
      %p49 = scmp.eq.s32.totalorder %s16, 0
      %p50 = por %p48, %p49
      %p51 = scmp.ne.s32.totalorder %s40, %s43
      %p52 = scmp.eq.s32.totalorder %s21, 1
      %p53 = por %p51, %p52
      %p54 = scmp.ne.s32.totalorder %s43, %s44
      %p55 = scmp.eq.s32.totalorder %s21, 0
      %p56 = por %p54, %p55
      %p57 = scmp.ne.s32.totalorder %s43, %s44
      %p58 = scmp.eq.s32.totalorder %s22, 1
      %p59 = por %p57, %p58
      %p61 = scmp.ne.s32.totalorder %s44, %s60
      %p62 = scmp.eq.s32.totalorder %s22, 0
      %p63 = por %p61, %p62
      %s65 = sadd.s32 %s64, 1
      %p68 = scmp.eq.s32.totalorder %s16, 1
      %p69 = scmp.ne.s32.totalorder %s64, %s66
      %p70 = scmp.eq.s32.totalorder %s16, 0
      %p71 = por %p69, %p70
      %p72 = scmp.ne.s32.totalorder %s64, %s66
      %p73 = scmp.eq.s32.totalorder %s21, 1
      %p74 = por %p72, %p73
      %p75 = scmp.ne.s32.totalorder %s66, %s67
      %p76 = scmp.eq.s32.totalorder %s21, 0
      %p77 = por %p75, %p76
      %p78 = scmp.ne.s32.totalorder %s66, %s67
      %p79 = scmp.eq.s32.totalorder %s22, 1
      %p80 = por %p78, %p79
      %p82 = scmp.ne.s32.totalorder %s67, %s81
      %p83 = scmp.eq.s32.totalorder %s22, 0
      %p84 = por %p82, %p83
      %s85 = ssub.s32 %s23, %s35
      %s86 = ssub.s32 %s24, %s31
      %s87 = sor.u32 %s85, %s86
      %p88 = scmp.eq.s32.totalorder %s87, 0
      %s90 = sadd.s32 %s89, 1
      %s91 = scalar_select %p88, %s89, %s90
      %p94 = pneg %p88
      %p95 = scmp.eq.s32.totalorder %s16, 1
      %p96 = por %p94, %p95
      %p97 = scmp.ne.s32.totalorder %s89, %s92
      %p98 = scmp.eq.s32.totalorder %s16, 0
      %p99 = por %p97, %p98
      %p100 = scmp.ne.s32.totalorder %s89, %s92
      %p101 = scmp.eq.s32.totalorder %s21, 1
      %p102 = por %p100, %p101
      %p103 = scmp.ne.s32.totalorder %s92, %s93
      %p104 = scmp.eq.s32.totalorder %s21, 0
      %p105 = por %p103, %p104
      %p106 = scmp.ne.s32.totalorder %s92, %s93
      %p107 = scmp.eq.s32.totalorder %s22, 1
      %p108 = por %p106, %p107
      %p110 = scmp.ne.s32.totalorder %s93, %s109
      %p111 = scmp.eq.s32.totalorder %s22, 0
      %p112 = por %p110, %p111
      %s113 = ssub.s32 %s23, %s35
      %s114 = ssub.s32 %s24, %s31
      %s115 = sor.u32 %s113, %s114
      %p116 = scmp.eq.s32.totalorder %s115, 0
      %s118 = sadd.s32 %s117, 1
      %s119 = scalar_select %p116, %s117, %s118
      %p122 = pneg %p116
      %p123 = scmp.eq.s32.totalorder %s16, 1
      %p124 = por %p122, %p123
      %p125 = scmp.ne.s32.totalorder %s117, %s120
      %p126 = scmp.eq.s32.totalorder %s16, 0
      %p127 = por %p125, %p126
      %p128 = scmp.ne.s32.totalorder %s117, %s120
      %p129 = scmp.eq.s32.totalorder %s21, 1
      %p130 = por %p128, %p129
      %p131 = scmp.ne.s32.totalorder %s120, %s121
      %p132 = scmp.eq.s32.totalorder %s21, 0
      %p133 = por %p131, %p132
      %p134 = scmp.ne.s32.totalorder %s120, %s121
      %p135 = scmp.eq.s32.totalorder %s22, 1
      %p136 = por %p134, %p135
      %p138 = scmp.ne.s32.totalorder %s121, %s137
      %p139 = scmp.eq.s32.totalorder %s22, 0
      %p140 = por %p138, %p139
      %p141 = scmp.le.s32.totalorder 1, %s16
      %p142 = scmp.lt.s32.totalorder %s16, 3
      %p143 = pnand %p141, %p142
      %p144 = pneg %p143
      // Predicated region
      $region9: #{tpu_custom_call.1} parent=5 // pred_check
        _
      $region10: #{tpu_custom_call.1} parent=5 // pred_check_branch
        %146 = sbr.rel (%p143) target = $region12
      $region11: #{tpu_custom_call.1} parent=5 // pred_region
        %s147 = ssub.s32 %s16, 1
        // Predicated region
        $region13: #{tpu_custom_call.1} parent=11 // pred_check
          %p148 = pneg %p77
        $region14: #{tpu_custom_call.1} parent=11 // pred_check_branch
          %150 = sbr.rel (%p148) target = $region16
        $region15: #{tpu_custom_call.1} parent=11 // pred_region
          _
        $region16: #{tpu_custom_call.1} parent=11 // pred_fallthru
          _
      $region12: #{tpu_custom_call.1} parent=5 // pred_fallthru
        _
      %p151 = scmp.lt.s32.totalorder %s16, 2
      // Predicated region
      $region17: #{tpu_custom_call.1} parent=5 // pred_check
        %p152 = pneg %p151
      $region18: #{tpu_custom_call.1} parent=5 // pred_check_branch
        %154 = sbr.rel (%p152) target = $region20
      $region19: #{tpu_custom_call.1} parent=5 // pred_region
        // Predicated region
        $region21: #{tpu_custom_call.1} parent=19 // pred_check
          %p155 = pneg %p50
        $region22: #{tpu_custom_call.1} parent=19 // pred_check_branch
          %157 = sbr.rel (%p155) target = $region24
        $region23: #{tpu_custom_call.1} parent=19 // pred_region
          %p158 = scmp.lt.s32.totalorder %s23, 1
          %s159 = scalar_select %p158, %s23, 1
          %p160 = scmp.lt.s32.totalorder %s24, 0
          %s161 = scalar_select %p160, %s24, 0
          %s162 = smul.addr %s161, 2
          %s163 = smul.addr %s159, 2
          %s164 = sadd.s32 %s162, %s163
          %s165 = smul.addr %s164, 8
          %s166 = scalar_lea.vmem %s0, %s165
        $region24: #{tpu_custom_call.1} parent=19 // pred_fallthru
          _
      $region20: #{tpu_custom_call.1} parent=5 // pred_fallthru
        _
      %p167 = scmp.le.s32.totalorder 1, %s16
      %p168 = scmp.lt.s32.totalorder %s16, 3
      %p169 = pnand %p167, %p168
      %p170 = pneg %p169
      // Predicated region
      $region25: #{tpu_custom_call.1} parent=5 // pred_check
        _
      $region26: #{tpu_custom_call.1} parent=5 // pred_check_branch
        %172 = sbr.rel (%p169) target = $region28
      $region27: #{tpu_custom_call.1} parent=5 // pred_region
        %s173 = ssub.s32 %s16, 1
        %p174 = scmp.lt.s32.totalorder %s25, 1
        %s175 = scalar_select %p174, %s25, 1
        %p176 = scmp.lt.s32.totalorder %s26, 0
        %s177 = scalar_select %p176, %s26, 0
        %s178 = smul.addr %s177, 2
        %s179 = smul.addr %s175, 2
        %s180 = sadd.s32 %s178, %s179
        %s181 = smul.addr %s180, 8
        %s182 = scalar_lea.vmem %s0, %s181
        %p183 = pneg %p56
        %p184 = pneg %p53
        %p185 = pneg %p77
        %p186 = pneg %p74
        %p187 = pneg %p105
        %p188 = pneg %p102
        %s189 = sand.u32 %s92, 1
        %s190 = scalar_lea.sflag [#allocation3], %s189
        %s191 = sand.u32 %s92, 1
        %s192 = smul.addr %s191, 16
        %s193 = scalar_lea.vmem [#allocation2], %s192
        %p194 = pneg %p133
        %p195 = pneg %p130
        %s196 = sand.u32 %s120, 1
        %s197 = scalar_lea.sflag [#allocation5], %s196
        %s198 = sand.u32 %s120, 1
        %s199 = smul.addr %s198, 16
        %s200 = scalar_lea.vmem [#allocation4], %s199
        %p201 = scmp.lt.s32.totalorder %s25, 1
        %s202 = scalar_select %p201, %s25, 1
        %p203 = scmp.lt.s32.totalorder %s26, 0
        %s204 = scalar_select %p203, %s26, 0
        %s205 = smul.addr %s204, 2
        %s206 = smul.addr %s202, 2
        %s207 = sadd.s32 %s205, %s206
        %s208 = smul.addr %s207, 8
        %s209 = scalar_lea.vmem %s0, %s208
        %v210 = vld [vmem:[%s1] sm:$0xff]
        %v211 = vld [vmem:[%s1 + $0x8] sm:$0xff]
        %v212 = vld [vmem:[%s1 + $0x10] sm:$0xff]
        %v213 = vld [vmem:[%s1 + $0x18] sm:$0xff]
        %v214 = vld [vmem:[%s209] sm:$0xff]
        %v215 = vld [vmem:[%s209 + $0x8] sm:$0xff]
        %220 = vrot.lane.b32.xlu0 %v210, 120
        %v221 = vpop.permute.xlu0 %220
        %222 = vrot.lane.b32.xlu0 %v211, 120
        %v223 = vpop.permute.xlu0 %222
        %224 = vrot.lane.b32.xlu0 %v212, 120
        %v225 = vpop.permute.xlu0 %224
        %226 = vrot.lane.b32.xlu0 %v213, 120
        %v227 = vpop.permute.xlu0 %226
        %230 = vrot.lane.b32.xlu0 %v214, 127
        %v231 = vpop.permute.xlu0 %230
        %232 = vrot.lane.b32.xlu0 %v215, 127
        %v233 = vpop.permute.xlu0 %232
        %vm234 = vcmask 1039360
        %v235 = vsel %vm234, %v231, %v233
        %vm237 = vcmask 64512
        %v238 = vsel %vm237, %v221, 0
        %v240 = vsel %vm237, %v223, 0
        %v242 = vsel %vm237, %v225, 0
        %v244 = vsel %vm237, %v227, 0
        %246 = vmatpush.msra.mxu0 0.0
        %247 = vmatpush.msra.mxu0 0.0
        %248 = vmatpush.msra.mxu0 0.0
        %249 = vmatpush.msra.mxu0 0.0
        %250 = vmatpush.msra.mxu0 0.0
        %251 = vmatpush.msra.mxu0 0.0
        %252 = vmatpush.msra.mxu0 0.0
        %253 = vmatpush.msra.mxu0 0.0
        %254 = vmatpush.msra.mxu0 0.0
        %255 = vmatpush.msra.mxu0 0.0
        %256 = vmatpush.msra.mxu0 0.0
        %257 = vmatpush.msra.mxu0 0.0
        %258 = vmatpush.msra.mxu0 0.0
        %259 = vmatpush.msra.mxu0 0.0
        %260 = vmatpush.msra.mxu0 0.0
        %261 = vmatpush.msra.mxu0 %v235
        %262 = vmatmul.f32.gmra.mxu0 %v238
        %v263 = vpop.f32.mrf.mxu0
        %v264 = vadd.f32 0.0, %v263
        %265 = vmatmul.f32.gmra.mxu0 %v240
        %v266 = vpop.f32.mrf.mxu0
        %v267 = vadd.f32 0.0, %v266
        %268 = vmatmul.f32.gmra.mxu0 %v242
        %v269 = vpop.f32.mrf.mxu0
        %v270 = vadd.f32 0.0, %v269
        %271 = vmatmul.f32.gmra.mxu0 %v244
        %v272 = vpop.f32.mrf.mxu0
        %v273 = vadd.f32 0.0, %v272
        %274 = vdwg.mxu0
        %v275 = vsel %vm237, %v210, 0
        %v277 = vsel %vm237, %v211, 0
        %v279 = vsel %vm237, %v212, 0
        %v281 = vsel %vm237, %v213, 0
        %283 = vmatpush.msra.mxu0 0.0
        %284 = vmatpush.msra.mxu0 0.0
        %285 = vmatpush.msra.mxu0 0.0
        %286 = vmatpush.msra.mxu0 0.0
        %287 = vmatpush.msra.mxu0 0.0
        %288 = vmatpush.msra.mxu0 0.0
        %289 = vmatpush.msra.mxu0 0.0
        %290 = vmatpush.msra.mxu0 0.0
        %291 = vmatpush.msra.mxu0 0.0
        %292 = vmatpush.msra.mxu0 0.0
        %293 = vmatpush.msra.mxu0 0.0
        %294 = vmatpush.msra.mxu0 0.0
        %295 = vmatpush.msra.mxu0 0.0
        %296 = vmatpush.msra.mxu0 0.0
        %297 = vmatpush.msra.mxu0 0.0
        %298 = vmatpush.msra.mxu0 %v214
        %299 = vmatmul.f32.gmra.mxu0 %v275
        %v300 = vpop.f32.mrf.mxu0
        %v301 = vadd.f32 %v264, %v300
        %302 = vmatmul.f32.gmra.mxu0 %v277
        %v303 = vpop.f32.mrf.mxu0
        %v304 = vadd.f32 %v267, %v303
        %305 = vmatmul.f32.gmra.mxu0 %v279
        %v306 = vpop.f32.mrf.mxu0
        %v307 = vadd.f32 %v270, %v306
        %308 = vmatmul.f32.gmra.mxu0 %v281
        %v309 = vpop.f32.mrf.mxu0
        %v310 = vadd.f32 %v273, %v309
        %311 = vdwg.mxu0
        %v312 = vmul.f32 %v301, %v301
        %v313 = vmul.f32 %v304, %v304
        %v314 = vmul.f32 %v307, %v307
        %v315 = vmul.f32 %v310, %v310
        %v316 = vadd.f32 %v312, %v314
        %v317 = vadd.f32 %v313, %v315
        %v318 = vadd.f32 %v316, 1e-30
        %v319 = vadd.f32 %v317, 1e-30
        %v320 = vrsqrt.pop %v318
        %v321 = vmul.f32 %v320, %v318
        %v322 = vmul.f32 %v321, %v320
        %v323 = vmul.f32 0.5, %v322
        %v324 = vsub.f32 1.5, %v323
        %v325 = vmul.f32 %v320, %v324
        %vm326 = vweird.f32 %v318
        %vm327 = vweird.f32 %v320
        %vm328 = vmor %vm326, %vm327
        %v329 = vsel %vm328, %v320, %v325
        %v330 = vrsqrt.pop %v319
        %v331 = vmul.f32 %v330, %v319
        %v332 = vmul.f32 %v331, %v330
        %v333 = vmul.f32 0.5, %v332
        %v334 = vsub.f32 1.5, %v333
        %v335 = vmul.f32 %v330, %v334
        %vm336 = vweird.f32 %v319
        %vm337 = vweird.f32 %v330
        %vm338 = vmor %vm336, %vm337
        %v339 = vsel %vm338, %v330, %v335
        %v340 = vmul.f32 %v316, %v329
        %v341 = vmul.f32 %v317, %v339
        %342 = vst [vmem:[%s193] sm:$0xff] %v340
        %343 = vst [vmem:[%s193 + $0x8] sm:$0xff] %v341
        %v344 = vand.u32 2147483647, %v301
        %v345 = vand.u32 2147483647, %v304
        %v346 = vand.u32 2147483647, %v307
        %v347 = vand.u32 2147483647, %v310
        %v348 = vmax.f32 %v344, %v346
        %v349 = vmax.f32 %v345, %v347
        %v350 = vmin.f32 %v344, %v346
        %v351 = vmin.f32 %v345, %v347
        %v352 = vmax.f32 %v348, 1e-30
        %v353 = vmax.f32 %v349, 1e-30
        %v354 = vrcp.pop %v352
        %v355 = vmul.f32 %v352, %v354
        %v356 = vsub.f32 1.0, %v355
        %v357 = vmul.f32 %v354, %v356
        %v358 = vadd.f32 %v354, %v357
        %vm359 = vweird.f32 %v352
        %vm360 = vweird.f32 %v354
        %vm361 = vmor %vm359, %vm360
        %v362 = vsel %vm361, %v354, %v358
        %v363 = vand.u32 2147483647, %v352
        %vm364 = vcmp.eq.f32.partialorder %v363, 8.507059e+37
        %v365 = vand.u32 %v352, 2147483648
        %v366 = vor.u32 1.1754944e-38, %v365
        %v367 = vsel %vm364, %v366, %v362
        %v368 = vmul.f32 %v350, %v367
        %v369 = vrcp.pop %v353
        %v370 = vmul.f32 %v353, %v369
        %v371 = vsub.f32 1.0, %v370
        %v372 = vmul.f32 %v369, %v371
        %v373 = vadd.f32 %v369, %v372
        %vm374 = vweird.f32 %v353
        %vm375 = vweird.f32 %v369
        %vm376 = vmor %vm374, %vm375
        %v377 = vsel %vm376, %v369, %v373
        %v378 = vand.u32 2147483647, %v353
        %vm379 = vcmp.eq.f32.partialorder %v378, 8.507059e+37
        %v380 = vand.u32 %v353, 2147483648
        %v381 = vor.u32 1.1754944e-38, %v380
        %v382 = vsel %vm379, %v381, %v377
        %v383 = vmul.f32 %v351, %v382
        %v384 = vmul.f32 %v368, %v368
        %v385 = vmul.f32 %v383, %v383
        %v386 = vmul.f32 %v384, 0.0208351
        %v387 = vmul.f32 %v385, 0.0208351
        %v388 = vsub.f32 %v386, 0.085133
        %v389 = vsub.f32 %v387, 0.085133
        %v390 = vmul.f32 %v388, %v384
        %v391 = vmul.f32 %v389, %v385
        %v392 = vadd.f32 %v390, 0.180141
        %v393 = vadd.f32 %v391, 0.180141
        %v394 = vmul.f32 %v392, %v384
        %v395 = vmul.f32 %v393, %v385
        %v396 = vsub.f32 %v394, 0.3302995
        %v397 = vsub.f32 %v395, 0.3302995
        %v398 = vmul.f32 %v396, %v384
        %v399 = vmul.f32 %v397, %v385
        %v400 = vadd.f32 %v398, 0.999866
        %v401 = vadd.f32 %v399, 0.999866
        %v402 = vmul.f32 %v400, %v368
        %v403 = vmul.f32 %v401, %v383
        %vm404 = vcmp.gt.f32.partialorder %v346, %v344
        %vm405 = vcmp.gt.f32.partialorder %v347, %v345
        %v406 = vsub.f32 1.5707964, %v402
        %v407 = vsub.f32 1.5707964, %v403
        %v408 = vsel %vm404, %v406, %v402
        %v409 = vsel %vm405, %v407, %v403
        %vm410 = vcmp.lt.f32.partialorder %v301, 0.0
        %vm411 = vcmp.lt.f32.partialorder %v304, 0.0
        %v412 = vsub.f32 3.1415927, %v408
        %v413 = vsub.f32 3.1415927, %v409
        %v414 = vsel %vm410, %v412, %v408
        %v415 = vsel %vm411, %v413, %v409
        %vm416 = vcmp.lt.f32.partialorder %v307, 0.0
        %vm417 = vcmp.lt.f32.partialorder %v310, 0.0
        %v418 = vsub.f32 0.0, %v414
        %v419 = vsub.f32 0.0, %v415
        %v420 = vsel %vm416, %v418, %v414
        %v421 = vsel %vm417, %v419, %v415
        %422 = vst [vmem:[%s200] sm:$0xff] %v420
        %423 = vst [vmem:[%s200 + $0x8] sm:$0xff] %v421
        %s424 = sand.u32 %s92, 1
        %s425 = scalar_lea.sflag [#allocation3], %s424
        %s426 = sand.u32 %s92, 1
        %s427 = smul.addr %s426, 16
        %s428 = scalar_lea.vmem [#allocation2], %s427
        %s429 = sand.u32 %s120, 1
        %s430 = scalar_lea.sflag [#allocation5], %s429
        %s431 = sand.u32 %s120, 1
        %s432 = smul.addr %s431, 16
        %s433 = scalar_lea.vmem [#allocation4], %s432
        // Predicated region
        $region29: #{tpu_custom_call.1} parent=27 // pred_check
          %p434 = pneg %p102
        $region30: #{tpu_custom_call.1} parent=27 // pred_check_branch
          %436 = sbr.rel (%p434) target = $region32
        $region31: #{tpu_custom_call.1} parent=27 // pred_region
          %438 = vsyncadd %s425, 0
          %s439 = smul.addr %s25, 2
          %s440 = sadd.s32 %s26, %s439
          %s441 = smul.addr %s440, 8
          %s442 = scalar_lea.hbm %s2, %s441
          %s443 = sshll.u32 %s428, 4
          %s444 = int_to_ptr.vmem [resolvable:$true] %s443
          %s445 = sshll.u32 %s442, 4
          %s446 = int_to_ptr.hbm [resolvable:$true] %s445
          %451 = dma.vmem_to_hbm [thread:$0]  %s444, 256, %s446, %s425, 128, 128, 8
        $region32: #{tpu_custom_call.1} parent=27 // pred_fallthru
          _
        // Predicated region
        $region33: #{tpu_custom_call.1} parent=27 // pred_check
          %p452 = pneg %p130
        $region34: #{tpu_custom_call.1} parent=27 // pred_check_branch
          %454 = sbr.rel (%p452) target = $region36
        $region35: #{tpu_custom_call.1} parent=27 // pred_region
          %456 = vsyncadd %s430, 0
          %s457 = smul.addr %s25, 2
          %s458 = sadd.s32 %s26, %s457
          %s459 = smul.addr %s458, 8
          %s460 = scalar_lea.hbm %s3, %s459
          %s461 = sshll.u32 %s433, 4
          %s462 = int_to_ptr.vmem [resolvable:$true] %s461
          %s463 = sshll.u32 %s460, 4
          %s464 = int_to_ptr.hbm [resolvable:$true] %s463
          %469 = dma.vmem_to_hbm [thread:$0]  %s462, 256, %s464, %s430, 128, 128, 8
        $region36: #{tpu_custom_call.1} parent=27 // pred_fallthru
          _
      $region28: #{tpu_custom_call.1} parent=5 // pred_fallthru
        _
      %p470 = scmp.le.s32.totalorder 2, %s16
      // Predicated region
      $region37: #{tpu_custom_call.1} parent=5 // pred_check
        %p471 = pneg %p470
      $region38: #{tpu_custom_call.1} parent=5 // pred_check_branch
        %473 = sbr.rel (%p471) target = $region40
      $region39: #{tpu_custom_call.1} parent=5 // pred_region
        %s474 = ssub.s32 %s16, 2
        // Predicated region
        $region41: #{tpu_custom_call.1} parent=39 // pred_check
          %p475 = pneg %p108
        $region42: #{tpu_custom_call.1} parent=39 // pred_check_branch
          %477 = sbr.rel (%p475) target = $region44
        $region43: #{tpu_custom_call.1} parent=39 // pred_region
          %s478 = sand.u32 %s93, 1
          %s479 = scalar_lea.sflag [#allocation3], %s478
          %s480 = sand.u32 %s93, 1
          %s481 = smul.addr %s480, 16
          %s482 = scalar_lea.vmem [#allocation2], %s481
          %484 = dma.done %s479, 256
        $region44: #{tpu_custom_call.1} parent=39 // pred_fallthru
          _
        // Predicated region
        $region45: #{tpu_custom_call.1} parent=39 // pred_check
          %p485 = pneg %p136
        $region46: #{tpu_custom_call.1} parent=39 // pred_check_branch
          %487 = sbr.rel (%p485) target = $region48
        $region47: #{tpu_custom_call.1} parent=39 // pred_region
          %s488 = sand.u32 %s121, 1
          %s489 = scalar_lea.sflag [#allocation5], %s488
          %s490 = sand.u32 %s121, 1
          %s491 = smul.addr %s490, 16
          %s492 = scalar_lea.vmem [#allocation4], %s491
          %494 = dma.done %s489, 256
        $region48: #{tpu_custom_call.1} parent=39 // pred_fallthru
          _
      $region40: #{tpu_custom_call.1} parent=5 // pred_fallthru
        _
    $region6: #{tpu_custom_call.1} parent=1 // loop_footer
      %s20 = sadd.s32 1, %s16
    $region7: #{tpu_custom_call.1} parent=1 // loop_footer_branch
      %15 = sbr.rel target = $region3
    $region8: #{tpu_custom_call.1} parent=1 // loop_exit
      _
    %495 = vsyncpa [#allocation3], 1
    %s496 = scalar_lea.sflag [#allocation3], 1
    %497 = vsyncpa %s496, 1
    %498 = vsyncpa [#allocation5], 1
    %s499 = scalar_lea.sflag [#allocation5], 1
    %500 = vsyncpa %s499, 1

</llo_original>
